<compile_context>
chip_gen: v5e
topology: v5e:2x2
jax: 0.10.0
libtpu: 0.0.40
codegen_flags: <defaults>
</compile_context>

<pallas_src>
import functools

import jax
import jax.numpy as jnp
from jax import lax
from jax.experimental import pallas as pl
from jax.experimental.pallas import tpu as pltpu

C_MXU = 128        # W / bias padded to a full lane register for the MXU N dim
C_OUT = 8          # lanes written back for the probability output (>= 5 classes)
_NEG = -1.0e30     # "minus infinity" that stays finite in f32 arithmetic


def _round_up(x, m):
    return ((x + m - 1) // m) * m


def _masked_softmax(logits, valid):
    logits = jnp.where(valid, logits, _NEG)
    m = jnp.max(logits, axis=-1, keepdims=True)
    e = jnp.exp(logits - m)                              # pad lanes underflow to 0
    return e / jnp.sum(e, axis=-1, keepdims=True)        # exact f32 normalization


def _linear_softmax_kernel(x_ref, w_ref, b_ref, out_ref, *, num_classes):
    # x_ref: (tb, D) f32   w_ref: (D, C_MXU) bf16   b_ref: (1, C_MXU) f32
    # out_ref: (tb, C_OUT) f32
    x = x_ref[...].astype(jnp.bfloat16)                  # in-kernel cast, hides under MXU
    logits = jnp.dot(x, w_ref[...], preferred_element_type=jnp.float32)
    logits = logits + b_ref[...]                         # exact f32 bias add
    col = lax.broadcasted_iota(jnp.int32, logits.shape, 1)
    p = _masked_softmax(logits, col < num_classes)       # pad lanes are exactly 0
    out_ref[...] = p[:, :C_OUT]                          # slim (tb, 8) writeback


def _linear_softmax_ce_kernel(x_ref, w_ref, b_ref, y_ref, nll_ref, *, num_classes):
    # Fused training path: per-row CrossEntropyLoss(softmax(xW + b), target).
    # (PyTorch's CrossEntropyLoss re-applies log_softmax on top of the softmax
    #  output, exactly as the original module does.)
    x = x_ref[...].astype(jnp.bfloat16)
    logits = jnp.dot(x, w_ref[...], preferred_element_type=jnp.float32)
    logits = logits + b_ref[...]
    col = lax.broadcasted_iota(jnp.int32, logits.shape, 1)
    valid = col < num_classes
    p = _masked_softmax(logits, valid)                   # probs, pad lanes exactly 0
    # log-sum-exp over the probabilities; p is in [0, 1] so no max-centering needed.
    lse = jnp.log(jnp.sum(jnp.where(valid, jnp.exp(p), 0.0), axis=-1, keepdims=True))
    p_t = jnp.sum(jnp.where(col == y_ref[...], p, 0.0), axis=-1, keepdims=True)
    nll_ref[...] = lse - p_t                             # (tb, 1) per-row NLL


def _prep_params(w, b):
    D, C = w.shape
    assert C <= C_OUT
    w_p = jnp.zeros((D, C_MXU), jnp.bfloat16).at[:, :C].set(w.astype(jnp.bfloat16))
    b_p = jnp.zeros((1, C_MXU), jnp.float32).at[0, :C].set(b.astype(jnp.float32))
    return w_p, b_p, C


def _choose_tb(batch, tb):
    tb = max(8, (tb // 8) * 8)                 # sublane/MXU-friendly multiple of 8
    return min(tb, _round_up(batch, 8))        # don't over-pad tiny batches


def _compiler_params(tb, d, out_lanes, extra_cols):
    # Budget VMEM explicitly (double-buffered per-step footprint).
    est = 2 * (tb * d * 4                      # f32 x tile
               + tb * out_lanes * 4            # f32 output tile
               + tb * extra_cols * 4           # int32 target column (CE path)
               + d * C_MXU * 2                 # bf16 W (resident)
               + C_MXU * 4)                    # f32 bias
    limit = min(64 << 20, max(32 << 20, 2 * est))   # stay under v7x physical VMEM
    return pltpu.CompilerParams(
        dimension_semantics=("parallel",),
        vmem_limit_bytes=limit,
    )


@functools.partial(jax.jit, static_argnames=("tb",))
def linear_softmax(x, w, b, *, tb=256):
    """y_pred = softmax(x @ w + b, axis=1), computed in a single fused kernel."""
    B, D = x.shape
    w_p, b_p, C = _prep_params(w, b)
    tb = _choose_tb(B, tb)
    Bp = _round_up(B, tb)
    x_p = x.astype(jnp.float32)
    if Bp != B:
        x_p = jnp.pad(x_p, ((0, Bp - B), (0, 0)))
    out = pl.pallas_call(
        functools.partial(_linear_softmax_kernel, num_classes=C),
        out_shape=jax.ShapeDtypeStruct((Bp, C_OUT), jnp.float32),
        grid_spec=pltpu.PrefetchScalarGridSpec(
            num_scalar_prefetch=0,
            grid=(Bp // tb,),
            in_specs=[
                pl.BlockSpec((tb, D), lambda i: (i, 0)),       # batch-tiled f32 x
                pl.BlockSpec((D, C_MXU), lambda i: (0, 0)),    # resident bf16 W
                pl.BlockSpec((1, C_MXU), lambda i: (0, 0)),    # resident f32 bias
            ],
            out_specs=pl.BlockSpec((tb, C_OUT), lambda i: (i, 0)),
        ),
        compiler_params=_compiler_params(tb, D, C_OUT, 0),
    )(x_p, w_p, b_p)
    return out[:B, :C]


@functools.partial(jax.jit, static_argnames=("tb",))
def linear_softmax_ce_loss(x, w, b, y, *, tb=256):
    """mean_i CrossEntropyLoss(softmax(x@w+b), argmax(y, axis=1)), NLL fused in-kernel."""
    B, D = x.shape
    w_p, b_p, C = _prep_params(w, b)
    tb = _choose_tb(B, tb)
    Bp = _round_up(B, tb)
    x_p = x.astype(jnp.float32)
    targets = jnp.argmax(y, axis=1).astype(jnp.int32)[:, None]   # (B, 1) int32 column
    if Bp != B:
        x_p = jnp.pad(x_p, ((0, Bp - B), (0, 0)))
        targets = jnp.pad(targets, ((0, Bp - B), (0, 0)))
    nll = pl.pallas_call(
        functools.partial(_linear_softmax_ce_kernel, num_classes=C),
        out_shape=jax.ShapeDtypeStruct((Bp, 1), jnp.float32),
        grid_spec=pltpu.PrefetchScalarGridSpec(
            num_scalar_prefetch=0,
            grid=(Bp // tb,),
            in_specs=[
                pl.BlockSpec((tb, D), lambda i: (i, 0)),       # batch-tiled f32 x
                pl.BlockSpec((D, C_MXU), lambda i: (0, 0)),    # resident bf16 W
                pl.BlockSpec((1, C_MXU), lambda i: (0, 0)),    # resident f32 bias
                pl.BlockSpec((tb, 1), lambda i: (i, 0)),       # int32 target column
            ],
            out_specs=pl.BlockSpec((tb, 1), lambda i: (i, 0)),
        ),
        compiler_params=_compiler_params(tb, D, 1, 1),
    )(x_p, w_p, b_p, targets)
    return jnp.mean(nll[:B, 0])        # tiny batch-mean stays in the wrapper


def torch_model_forward(x, w, b, y=None):
    """Mirror TorchModel.forward: probabilities if y is None, else the CE loss."""
    if y is None:
        return linear_softmax(x, w, b)
    return linear_softmax_ce_loss(x, w, b, y)


def init_params(key, input_size, num_classes=5):
    # deterministic init mimicking nn.Linear default: U(-1/sqrt(in), 1/sqrt(in))
    kw, kb = jax.random.split(key)
    bound = 1.0 / jnp.sqrt(float(input_size))
    w = jax.random.uniform(kw, (input_size, num_classes), jnp.float32, -bound, bound)
    b = jax.random.uniform(kb, (num_classes,), jnp.float32, -bound, bound)
    return w, b


if __name__ == "__main__":
    key = jax.random.PRNGKey(0)
    kx, ky, kp = jax.random.split(key, 3)

    batch, input_size, num_classes = 32, 32, 5
    x = jax.random.normal(kx, (batch, input_size), jnp.float32)
    targets = jax.random.randint(ky, (batch,), 0, num_classes)
    y_onehot = jax.nn.one_hot(targets, num_classes).astype(jnp.float32)

    w, b = init_params(kp, input_size, num_classes)

    # inference path (y=None): probabilities
    y_pred = jax.block_until_ready(torch_model_forward(x, w, b))
    # training path (y given): scalar loss
    loss = jax.block_until_ready(torch_model_forward(x, w, b, y_onehot))

    # pure-JAX f32 reference (loose tolerance: kernel feeds the MXU bf16)
    logits_ref = x @ w + b
    probs_ref = jax.nn.softmax(logits_ref, axis=1)
    loss_ref = jnp.mean(
        -jnp.take_along_axis(jax.nn.log_softmax(probs_ref, axis=1),
                             targets[:, None], axis=1)[:, 0])

    assert y_pred.shape == (batch, num_classes)
    assert jnp.allclose(jnp.sum(y_pred, axis=1), 1.0, atol=1e-3)
    assert jnp.allclose(y_pred, probs_ref, atol=2e-2)
    assert loss.shape == ()
    assert jnp.allclose(loss, loss_ref, atol=2e-2)

    print("KERNEL_OK")
</pallas_src>

<mosaic_0001>
module attributes {stable_mosaic.version = 11 : i64} {
  func.func @_linear_softmax_kernel(%arg0: i32, %arg1: memref<32x32xf32, #tpu.memory_space<vmem>>, %arg2: memref<32x128xbf16, #tpu.memory_space<vmem>>, %arg3: memref<1x128xf32, #tpu.memory_space<vmem>>, %arg4: memref<32x8xf32, #tpu.memory_space<vmem>>) attributes {dimension_semantics = [#tpu.dimension_semantics<parallel>], iteration_bounds = array<i64: 1>, scalar_prefetch = 0 : i64, scratch_operands = 0 : i64, tpu.core_type = #tpu.core_type<tc>, window_params = [{transform_indices = @transform_0, window_bounds = array<i64: 32, 32>}, {pipeline_mode = #tpu.pipeline_mode<synchronous>, transform_indices = @transform_1, window_bounds = array<i64: 32, 128>}, {pipeline_mode = #tpu.pipeline_mode<synchronous>, transform_indices = @transform_2, window_bounds = array<i64: 1, 128>}, {transform_indices = @transform_3, window_bounds = array<i64: 32, 8>}]} {
    %c0 = arith.constant 0 : index
    %c0_0 = arith.constant 0 : index
    %0 = vector.load %arg1[%c0, %c0_0] : memref<32x32xf32, #tpu.memory_space<vmem>>, vector<32x32xf32>
    %1 = arith.truncf %0 : vector<32x32xf32> to vector<32x32xbf16>
    %c0_1 = arith.constant 0 : index
    %c0_2 = arith.constant 0 : index
    %2 = vector.load %arg2[%c0_1, %c0_2] : memref<32x128xbf16, #tpu.memory_space<vmem>>, vector<32x128xbf16>
    %cst = arith.constant dense<0.000000e+00> : vector<32x128xf32>
    %3 = tpu.matmul %1, %2, %cst {dimension_numbers = #tpu.dot_dimension_numbers<[1], [0], [0], [1], [0, 0, 1, 1], [], []>} : vector<32x32xbf16>, vector<32x128xbf16>, vector<32x128xf32> -> vector<32x128xf32>
    %c0_3 = arith.constant 0 : index
    %c0_4 = arith.constant 0 : index
    %4 = vector.load %arg3[%c0_3, %c0_4] : memref<1x128xf32, #tpu.memory_space<vmem>>, vector<1x128xf32>
    %5 = vector.broadcast %4 : vector<1x128xf32> to vector<32x128xf32>
    %6 = arith.addf %3, %5 : vector<32x128xf32>
    %7 = tpu.iota {dimensions = array<i32: 1>} : vector<32x128xi32>
    %c5_i32 = arith.constant 5 : i32
    %8 = vector.broadcast %c5_i32 : i32 to vector<32x128xi32>
    %9 = arith.cmpi slt, %7, %8 : vector<32x128xi32>
    %cst_5 = arith.constant -1.000000e+30 : f32
    %10 = vector.broadcast %cst_5 : f32 to vector<32x128xf32>
    %11 = arith.select %9, %6, %10 : vector<32x128xi1>, vector<32x128xf32>
    %cst_6 = arith.constant dense<0xFF800000> : vector<32xf32>
    %12 = vector.multi_reduction <maximumf>, %11, %cst_6 [1] : vector<32x128xf32> to vector<32xf32>
    %13 = vector.shape_cast %12 : vector<32xf32> to vector<32x1xf32>
    %14 = vector.broadcast %13 : vector<32x1xf32> to vector<32x128xf32>
    %15 = arith.subf %11, %14 : vector<32x128xf32>
    %16 = math.exp %15 : vector<32x128xf32>
    %cst_7 = arith.constant dense<0.000000e+00> : vector<32xf32>
    %17 = vector.multi_reduction <add>, %16, %cst_7 [1] : vector<32x128xf32> to vector<32xf32>
    %18 = vector.shape_cast %17 : vector<32xf32> to vector<32x1xf32>
    %19 = vector.broadcast %18 : vector<32x1xf32> to vector<32x128xf32>
    %20 = arith.divf %16, %19 : vector<32x128xf32>
    %21 = vector.extract_strided_slice %20 {offsets = [0, 0], sizes = [32, 8], strides = [1, 1]} : vector<32x128xf32> to vector<32x8xf32>
    %c0_8 = arith.constant 0 : index
    %c0_9 = arith.constant 0 : index
    %22 = vector.load %arg4[%c0_8, %c0_9] : memref<32x8xf32, #tpu.memory_space<vmem>>, vector<32x8xf32>
    tpu.vector_store %arg4[%c0_8, %c0_9], %21 {strides = array<i32>} : memref<32x8xf32, #tpu.memory_space<vmem>>, vector<32x8xf32>,
    return
  }
  func.func @transform_0(%arg0: i32) -> (i32, i32) {
    %c0_i32 = arith.constant 0 : i32
    %c0_i32_0 = arith.constant 0 : i32
    return %arg0, %c0_i32 : i32, i32
  }
  func.func @transform_1(%arg0: i32) -> (i32, i32) {
    %c0_i32 = arith.constant 0 : i32
    %c0_i32_0 = arith.constant 0 : i32
    %c0_i32_1 = arith.constant 0 : i32
    return %c0_i32, %c0_i32_0 : i32, i32
  }
  func.func @transform_2(%arg0: i32) -> (i32, i32) {
    %c0_i32 = arith.constant 0 : i32
    %c0_i32_0 = arith.constant 0 : i32
    %c0_i32_1 = arith.constant 0 : i32
    return %c0_i32, %c0_i32_0 : i32, i32
  }
  func.func @transform_3(%arg0: i32) -> (i32, i32) {
    %c0_i32 = arith.constant 0 : i32
    %c0_i32_0 = arith.constant 0 : i32
    return %arg0, %c0_i32 : i32, i32
  }
}

</mosaic_0001>

<llo_original>
// kernel: linear_softmax.1
$region0: #{linear_softmax.1}
  #allocation0 [shape = 'u32[]', space=smem, size = 0x4, offset = 0x4, fixed_abs, tag = 'smem constant byte address 0x4 - core index']
  #allocation1 [shape = 'u32[72,128]{1,0:T(1,128)}', space=vmem, size = 0x9000, scoped, tag = 'internal scratch']
  %s0 = inlined_call_operand.vmem [shape: f32[32,32], index: 0, kind: input, shape index: {}]
  %s1 = inlined_call_operand.vmem [shape: bf16[32,128], index: 1, kind: input, shape index: {}]
  %s2 = inlined_call_operand.vmem [shape: f32[1,128], index: 2, kind: input, shape index: {}]
  %s3 = inlined_call_operand.vmem [shape: f32[32,8], index: 3, kind: output, shape index: {}]
  %s4 = sld [smem:[#allocation0]]
  $region22: #{linear_softmax.1} parent=0
    _
  %s6 = ssub.s32 1, %s4
  %s7 = scalar_select 0, %s6, %s4
  // Predicated region
  $region2: #{linear_softmax.1} parent=0 // pred_check
    _
  $region3: #{linear_softmax.1} parent=0 // pred_check_branch
    %9 = sbr.rel (0) target = $region5
  $region4: #{linear_softmax.1} parent=0 // pred_region
    _
  $region5: #{linear_softmax.1} parent=0 // pred_fallthru
    _
  // Predicated region
  $region6: #{linear_softmax.1} parent=0 // pred_check
    _
  $region7: #{linear_softmax.1} parent=0 // pred_check_branch
    %11 = sbr.rel (0) target = $region9
  $region8: #{linear_softmax.1} parent=0 // pred_region
    _
  $region9: #{linear_softmax.1} parent=0 // pred_fallthru
    _
  // Predicated region
  $region10: #{linear_softmax.1} parent=0 // pred_check
    _
  $region11: #{linear_softmax.1} parent=0 // pred_check_branch
    %13 = sbr.rel (0) target = $region13
  $region12: #{linear_softmax.1} parent=0 // pred_region
    _
  $region13: #{linear_softmax.1} parent=0 // pred_fallthru
    _
  %v15 = vld [vmem:[%s0] sm:$0xff]
  %v16 = vld [vmem:[%s0 + $0x8] sm:$0xff]
  %v17 = vld [vmem:[%s0 + $0x10] sm:$0xff]
  %v18 = vld [vmem:[%s0 + $0x18] sm:$0xff]
  %v19 = vpack.c.bf16 %v16, %v15
  %v20 = vpack.c.bf16 %v18, %v17
  %v21 = vld [vmem:[%s1] sm:$0xf]
  %v22 = vld [vmem:[%s1 + $0x4] sm:$0xf]
  %v23 = vld [vmem:[%s1 + $0x8] sm:$0xf]
  %v24 = vld [vmem:[%s1 + $0xc] sm:$0xf]
  %v25 = vld [vmem:[%s2] sm:$0x1]
  %v27 = vperm.slane %v25, 0
  %v33 = vunpack.c.l.b16 %v21
  %v34 = vunpack.c.l.b16 %v22
  %v35 = vunpack.c.l.b16 %v23
  %v36 = vunpack.c.l.b16 %v24
  %v37 = vpack.c.b16 %v34, %v33
  %v38 = vpack.c.b16 %v36, %v35
  %vm41 = vcmask 261120
  %v43 = vsel %vm41, %v19, 0
  %v46 = vsel %vm41, %v20, 0
  %48 = vmatpush.bf16.msra.mxu0 0
  %49 = vmatpush.bf16.msra.mxu0 0
  %50 = vmatpush.bf16.msra.mxu0 0
  %51 = vmatpush.bf16.msra.mxu0 0
  %52 = vmatpush.bf16.msra.mxu0 0
  %53 = vmatpush.bf16.msra.mxu0 0
  %54 = vmatpush.bf16.msra.mxu0 %v38
  %55 = vmatpush.bf16.msra.mxu0 %v37
  %56 = vmatmul.bf16.gmra.mxu0 %v43
  %v57 = vpop.f32.mrf.mxu0
  %v58 = vadd.f32 %v27, %v57
  %v59 = vpop.f32.mrf.mxu0
  %v60 = vadd.f32 %v27, %v59
  %61 = vmatmul.bf16.gmra.mxu0 %v46
  %v62 = vpop.f32.mrf.mxu0
  %v63 = vadd.f32 %v27, %v62
  %v64 = vpop.f32.mrf.mxu0
  %v65 = vadd.f32 %v27, %v64
  %66 = vdwg.mxu0
  %v67 = vlaneseq
  %v68 = vand.u32 %v67, 127
  %vm69 = vcmp.lt.s32.totalorder %v68, 5
  %v70 = vsel %vm69, %v58, -1e+30
  %v71 = vsel %vm69, %v60, -1e+30
  %v72 = vsel %vm69, %v63, -1e+30
  %v73 = vsel %vm69, %v65, -1e+30
  %74 = vmax.xlane.f32.xlu0 %v70
  %v75 = vpop.xlane.xlu0 %74
  %76 = vmax.xlane.f32.xlu0 %v71
  %v77 = vpop.xlane.xlu0 %76
  %78 = vmax.xlane.f32.xlu0 %v72
  %v79 = vpop.xlane.xlu0 %78
  %80 = vmax.xlane.f32.xlu0 %v73
  %v81 = vpop.xlane.xlu0 %80
  %v82 = vsub.f32 %v70, %v75
  %v83 = vsub.f32 %v71, %v77
  %v84 = vsub.f32 %v72, %v79
  %v85 = vsub.f32 %v73, %v81
  %v86 = vmul.f32 %v82, 1.442695
  %v87 = vpow.pop %v86
  %v88 = vmul.f32 %v83, 1.442695
  %v89 = vpow.pop %v88
  %v90 = vmul.f32 %v84, 1.442695
  %v91 = vpow.pop %v90
  %v92 = vmul.f32 %v85, 1.442695
  %v93 = vpow.pop %v92
  %94 = vadd.xlane.f32.xlu0 %v87
  %v95 = vpop.xlane.xlu0 %94
  %96 = vadd.xlane.f32.xlu0 %v89
  %v97 = vpop.xlane.xlu0 %96
  %98 = vadd.xlane.f32.xlu0 %v91
  %v99 = vpop.xlane.xlu0 %98
  %100 = vadd.xlane.f32.xlu0 %v93
  %v101 = vpop.xlane.xlu0 %100
  %v102 = vrcp.pop %v95
  %v103 = vmul.f32 %v95, %v102
  %v104 = vsub.f32 1.0, %v103
  %v105 = vmul.f32 %v102, %v104
  %v106 = vadd.f32 %v102, %v105
  %vm107 = vweird.f32 %v95
  %vm108 = vweird.f32 %v102
  %vm109 = vmor %vm107, %vm108
  %v110 = vsel %vm109, %v102, %v106
  %v111 = vand.u32 2147483647, %v95
  %vm112 = vcmp.eq.f32.partialorder %v111, 8.507059e+37
  %v113 = vand.u32 %v95, 2147483648
  %v114 = vor.u32 1.1754944e-38, %v113
  %v115 = vsel %vm112, %v114, %v110
  %v116 = vmul.f32 %v87, %v115
  %v117 = vrcp.pop %v97
  %v118 = vmul.f32 %v97, %v117
  %v119 = vsub.f32 1.0, %v118
  %v120 = vmul.f32 %v117, %v119
  %v121 = vadd.f32 %v117, %v120
  %vm122 = vweird.f32 %v97
  %vm123 = vweird.f32 %v117
  %vm124 = vmor %vm122, %vm123
  %v125 = vsel %vm124, %v117, %v121
  %v126 = vand.u32 2147483647, %v97
  %vm127 = vcmp.eq.f32.partialorder %v126, 8.507059e+37
  %v128 = vand.u32 %v97, 2147483648
  %v129 = vor.u32 1.1754944e-38, %v128
  %v130 = vsel %vm127, %v129, %v125
  %v131 = vmul.f32 %v89, %v130
  %v132 = vrcp.pop %v99
  %v133 = vmul.f32 %v99, %v132
  %v134 = vsub.f32 1.0, %v133
  %v135 = vmul.f32 %v132, %v134
  %v136 = vadd.f32 %v132, %v135
  %vm137 = vweird.f32 %v99
  %vm138 = vweird.f32 %v132
  %vm139 = vmor %vm137, %vm138
  %v140 = vsel %vm139, %v132, %v136
  %v141 = vand.u32 2147483647, %v99
  %vm142 = vcmp.eq.f32.partialorder %v141, 8.507059e+37
  %v143 = vand.u32 %v99, 2147483648
  %v144 = vor.u32 1.1754944e-38, %v143
  %v145 = vsel %vm142, %v144, %v140
  %v146 = vmul.f32 %v91, %v145
  %v147 = vrcp.pop %v101
  %v148 = vmul.f32 %v101, %v147
  %v149 = vsub.f32 1.0, %v148
  %v150 = vmul.f32 %v147, %v149
  %v151 = vadd.f32 %v147, %v150
  %vm152 = vweird.f32 %v101
  %vm153 = vweird.f32 %v147
  %vm154 = vmor %vm152, %vm153
  %v155 = vsel %vm154, %v147, %v151
  %v156 = vand.u32 2147483647, %v101
  %vm157 = vcmp.eq.f32.partialorder %v156, 8.507059e+37
  %v158 = vand.u32 %v101, 2147483648
  %v159 = vor.u32 1.1754944e-38, %v158
  %v160 = vsel %vm157, %v159, %v155
  %v161 = vmul.f32 %v93, %v160
  %vm162 = vcmask 64512
  %163 = vst.msk [vmem:[%s3] sm:$0xff] %vm162, %v116
  %164 = vst.msk [vmem:[%s3 + $0x8] sm:$0xff] %vm162, %v131
  %165 = vst.msk [vmem:[%s3 + $0x10] sm:$0xff] %vm162, %v146
  %166 = vst.msk [vmem:[%s3 + $0x18] sm:$0xff] %vm162, %v161
  // Predicated region
  $region14: #{linear_softmax.1} parent=0 // pred_check
    _
  $region15: #{linear_softmax.1} parent=0 // pred_check_branch
    %168 = sbr.rel (0) target = $region17
  $region16: #{linear_softmax.1} parent=0 // pred_region
    _
  $region17: #{linear_softmax.1} parent=0 // pred_fallthru
    _
  // Predicated region
  $region18: #{linear_softmax.1} parent=0 // pred_check
    _
  $region19: #{linear_softmax.1} parent=0 // pred_check_branch
    %170 = sbr.rel (0) target = $region21
  $region20: #{linear_softmax.1} parent=0 // pred_region
    _
  $region21: #{linear_softmax.1} parent=0 // pred_fallthru
    _

</llo_original>
